<compile_context>
chip_gen: v7x
topology: tpu7x:2x2x1
jax: 0.10.0
libtpu: 0.0.40
codegen_flags: <defaults>
</compile_context>

<pallas_src>
import functools

import jax
import jax.numpy as jnp
from jax import lax
from jax.experimental import pallas as pl
from jax.experimental.pallas import tpu as pltpu


def _round_up(x, m):
    return (x + m - 1) // m * m


# ---------------------------------------------------------------------------
# Kernel 1: input_proj = nn.Conv2d(C_in, hidden_dim, kernel_size=1)
#   Native-layout tile: x block is (1, C, TP) -- pixels on lanes, channels on
#   sublanes -- contracted on axis 0 of both operands (no HBM transpose pass).
# ---------------------------------------------------------------------------
def _input_proj_kernel(x_ref, w_ref, b_ref, o_ref):
    x = x_ref[0]                                     # (C, TP) bf16
    acc = lax.dot_general(                           # (TP, D) f32 accumulation
        x, w_ref[...],
        dimension_numbers=(((0,), (0,)), ((), ())),
        preferred_element_type=jnp.float32)
    o_ref[0] = (acc + b_ref[...]).astype(o_ref.dtype)


def input_proj(x_nchw, w_bf16, b_f32, *, tile_pixels=512):
    """1x1 conv on native NCHW layout.  Returns channels-last [B, H*W, D] bf16."""
    B, C, H, W = x_nchw.shape
    D = w_bf16.shape[1]
    HW = H * W

    x3d = x_nchw.reshape(B, C, HW).astype(jnp.bfloat16)   # free reshape

    # Lane-dim constraint: pixel tile must be a multiple of 128 or the full
    # extent.  tile_pixels=512 is safe on all generations; bump toward
    # 1024-2048 on v6e (128 MiB VMEM) at real backbone sizes, keep >=2 grid
    # steps on v7x for megacore.
    # TODO(synk): at real sizes (C_in not a 128-multiple) zero-pad C/D to a
    # 128 multiple at weight-pack time to keep the MXU on its fast path.
    if HW % 128 == 0:
        tp = min(tile_pixels, HW)
    else:
        tp = HW
    grid = (B, pl.cdiv(HW, tp))

    cost = pl.CostEstimate(
        flops=2 * B * HW * C * D,
        transcendentals=0,
        bytes_accessed=B * HW * C * 2 + C * D * 2 + D * 4 + B * HW * D * 2,
    )
    out = pl.pallas_call(
        _input_proj_kernel,
        grid=grid,
        out_shape=jax.ShapeDtypeStruct((B, HW, D), jnp.bfloat16),
        in_specs=[
            pl.BlockSpec((1, C, tp), lambda b, i: (b, 0, i)),   # native-layout tile
            pl.BlockSpec((C, D), lambda b, i: (0, 0)),          # weights resident
            pl.BlockSpec((1, D), lambda b, i: (0, 0)),          # bias resident
        ],
        out_specs=pl.BlockSpec((1, tp, D), lambda b, i: (b, i, 0)),
        compiler_params=pltpu.CompilerParams(
            dimension_semantics=("parallel", "parallel"),
            vmem_limit_bytes=48 * 1024 * 1024,
        ),
        cost_estimate=cost,
    )(x3d, w_bf16, b_f32)
    return out


# ---------------------------------------------------------------------------
# One-time parameter preprocessing (hoisted out of the per-step forward).
#   packed-column layout of the [*, 128] head slab:
#     [cls(38) | arl(4) | srl(7) | crl(18) | box(4) | zero-pad]
#   w_small and the box-MLP final layer are stacked along K into one (2D, 128)
#   weight so the heads kernel needs a single 128-wide MXU matmul.
# ---------------------------------------------------------------------------
def pack_params(params):
    f32, bf16 = jnp.float32, jnp.bfloat16
    D = params["wb1"].shape[0]

    n_cls = params["wc"].shape[1]
    n_arl = params["wa"].shape[1]
    n_srl = params["ws"].shape[1]
    n_crl = params["wcr"].shape[1]
    n_box = params["wb3"].shape[1]
    o_cls = 0
    o_arl = o_cls + n_cls
    o_srl = o_arl + n_arl
    o_crl = o_srl + n_srl
    o_box = o_crl + n_crl
    o_end = o_box + n_box
    head_w = max(128, _round_up(o_end, 128))           # lane-dense slab width

    wcat = jnp.zeros((2 * D, head_w), f32)
    wcat = (wcat.at[:D, o_cls:o_arl].set(params["wc"])
                 .at[:D, o_arl:o_srl].set(params["wa"])
                 .at[:D, o_srl:o_crl].set(params["ws"])
                 .at[:D, o_crl:o_box].set(params["wcr"])
                 .at[D:, o_box:o_end].set(params["wb3"]))
    bpack = jnp.zeros((1, head_w), f32)
    bpack = (bpack.at[0, o_cls:o_arl].set(params["bc"])
                   .at[0, o_arl:o_srl].set(params["ba"])
                   .at[0, o_srl:o_crl].set(params["bs"])
                   .at[0, o_crl:o_box].set(params["bcr"])
                   .at[0, o_box:o_end].set(params["bb3"]))

    return {
        "w_proj": params["w_proj"].astype(bf16),
        "b_proj": params["b_proj"].reshape(1, -1).astype(f32),
        "wb1": params["wb1"].astype(bf16),
        "bb1": params["bb1"].reshape(1, D).astype(f32),
        "wb2": params["wb2"].astype(bf16),
        "bb2": params["bb2"].reshape(1, D).astype(f32),
        "wcat": wcat.astype(bf16),
        "bpack": bpack,
        "offsets": (o_cls, o_arl, o_srl, o_crl, o_box, o_end),
        "head_w": head_w,
        "hidden_dim": D,
    }


# ---------------------------------------------------------------------------
# Kernel 2: all DETR prediction heads fused, one lane-dense 128-wide output
# slab, one fused MXU matmul for {cls, arl, srl, crl, box-final}.
#   sigmoid is applied to the contiguous srl|crl|box lane range only.
# ---------------------------------------------------------------------------
def _heads_kernel(hs_ref, wb1_ref, bb1_ref, wb2_ref, bb2_ref, wcat_ref,
                  bpack_ref, o_ref, *, sig_lo, sig_hi):
    dot = functools.partial(jnp.dot, preferred_element_type=jnp.float32)
    hs = hs_ref[...]                                   # (TN, D) bf16

    # box MLP hidden layers: relu(W1) -> relu(W2)
    h = jnp.maximum(dot(hs, wb1_ref[...]) + bb1_ref[...], 0.0)
    h = jnp.maximum(dot(h.astype(hs.dtype), wb2_ref[...]) + bb2_ref[...], 0.0)

    # fused 128-wide matmul: [hs | h] @ [[w_small]; [wb3_packed]]
    cat = jnp.concatenate([hs, h.astype(hs.dtype)], axis=1)       # (TN, 2D)
    raw = dot(cat, wcat_ref[...]) + bpack_ref[...]                # (TN, 128) f32

    # NOTE: sigmoid lane range is correct only while srl|crl|box stay
    # contiguous and last in the packed column order.
    col = lax.broadcasted_iota(jnp.int32, raw.shape, 1)
    o_ref[...] = jnp.where((col >= sig_lo) & (col < sig_hi),
                           jax.nn.sigmoid(raw), raw)


def detr_heads(hs, packed, *, tile_rows=1024):
    """hs: [L, B, Q, D] -> dict of per-layer head outputs."""
    L, B, Q, D = hs.shape
    N = L * B * Q
    head_w = packed["head_w"]
    o_cls, o_arl, o_srl, o_crl, o_box, o_end = packed["offsets"]

    hs2d = hs.reshape(N, D).astype(jnp.bfloat16)
    # Right-sized grid: at inference N = B*Q so this collapses to grid=(1,).
    n8 = _round_up(N, 8)
    tn = min(tile_rows, n8)
    grid_n = pl.cdiv(n8, tn)
    n_pad = grid_n * tn
    if n_pad != N:
        hs2d = jnp.pad(hs2d, ((0, n_pad - N), (0, 0)))   # tiny; rows sliced off

    ins = [hs2d, packed["wb1"], packed["bb1"], packed["wb2"], packed["bb2"],
           packed["wcat"], packed["bpack"]]
    row_spec = pl.BlockSpec((tn, D), lambda i: (i, 0))
    const_spec = lambda shape: pl.BlockSpec(shape, lambda i: (0, 0))
    in_specs = [row_spec] + [const_spec(x.shape) for x in ins[1:]]

    cost = pl.CostEstimate(
        flops=2 * n_pad * D * (2 * D) + 2 * n_pad * (2 * D) * head_w,
        transcendentals=n_pad * (o_end - o_srl),
        bytes_accessed=(n_pad * D * 2 + 2 * D * D * 2 + 2 * D * head_w * 2
                        + head_w * 4 + 2 * D * 4 + n_pad * head_w * 4),
    )
    slab = pl.pallas_call(
        functools.partial(_heads_kernel, sig_lo=o_srl, sig_hi=o_end),
        grid=(grid_n,),
        out_shape=jax.ShapeDtypeStruct((n_pad, head_w), jnp.float32),
        in_specs=in_specs,
        out_specs=pl.BlockSpec((tn, head_w), lambda i: (i, 0)),
        compiler_params=pltpu.CompilerParams(
            dimension_semantics=("parallel",),
            vmem_limit_bytes=32 * 1024 * 1024,
        ),
        cost_estimate=cost,
    )(*ins)

    slab = slab[:N]
    cut = lambda lo, hi: slab[:, lo:hi].reshape(L, B, Q, hi - lo)
    return {
        "outputs_class": cut(o_cls, o_arl),
        "outputs_coord": cut(o_box, o_end),
        "outputs_arls": cut(o_arl, o_srl),
        "outputs_srls": cut(o_srl, o_crl),
        "outputs_crls": cut(o_crl, o_box),
    }


# ---------------------------------------------------------------------------
# Full DETR forward (synthetic backbone / transformer stand-ins).
# ---------------------------------------------------------------------------
def detr_forward(src, mask, params, packed, num_decoder_layers, aux_loss=False):
    """src: [B, C_in, H, W] (backbone feature map), mask: [B, H, W] bool."""
    B, C, H, W = src.shape
    D = packed["hidden_dim"]
    Q = params["query_embed"].shape[0]
    del mask  # TODO(synk): padding mask is consumed by the external transformer.

    proj = input_proj(src, packed["w_proj"], packed["b_proj"])   # [B, H*W, D] bf16

    # TODO(synk): external backbone/transformer modules; deterministic stub:
    # hs[l, b, q, :] = query_embed[q] + mean_{hw} proj[b, hw, :]
    pooled = jnp.mean(proj.astype(jnp.float32), axis=1)          # [B, D]
    hs = params["query_embed"][None, None, :, :] + pooled[None, :, None, :]
    hs = jnp.broadcast_to(hs, (num_decoder_layers, B, Q, D))

    # Heads only on the last decoder layer unless aux losses are requested.
    hs_for_heads = hs if aux_loss else hs[-1:]
    heads = detr_heads(hs_for_heads, packed)
    out = {
        "pred_logits": heads["outputs_class"][-1],
        "pred_boxes": heads["outputs_coord"][-1],
        "attention_distribution": heads["outputs_arls"][-1],
        "spatial_distribution": heads["outputs_srls"][-1],
        "contacting_distribution": heads["outputs_crls"][-1],
    }
    if aux_loss:
        out["aux_outputs"] = [
            {"pred_logits": a, "pred_boxes": b_, "attention_distribution": c,
             "spatial_distribution": d, "contacting_distribution": e}
            for a, b_, c, d, e in zip(
                heads["outputs_class"][:-1], heads["outputs_coord"][:-1],
                heads["outputs_arls"][:-1], heads["outputs_srls"][:-1],
                heads["outputs_crls"][:-1])
        ]
    return out, hs


# Pure-JAX f32 reference of the head math (for correctness check).
def heads_ref(hs, p):
    lin = lambda x, w, b: x @ w + b
    cls_o = lin(hs, p["wc"], p["bc"])
    h = jax.nn.relu(lin(hs, p["wb1"], p["bb1"]))
    h = jax.nn.relu(lin(h, p["wb2"], p["bb2"]))
    box_o = jax.nn.sigmoid(lin(h, p["wb3"], p["bb3"]))
    arl_o = lin(hs, p["wa"], p["ba"])
    srl_o = jax.nn.sigmoid(lin(hs, p["ws"], p["bs"]))
    crl_o = jax.nn.sigmoid(lin(hs, p["wcr"], p["bcr"]))
    return cls_o, box_o, arl_o, srl_o, crl_o


def make_params(key, c_in, hidden_dim, num_queries):
    ks = jax.random.split(key, 20)
    r = lambda k, shape, s=0.1: (s * jax.random.normal(k, shape)).astype(jnp.float32)
    return {
        "w_proj": r(ks[0], (c_in, hidden_dim)),
        "b_proj": r(ks[1], (hidden_dim,)),
        "query_embed": r(ks[2], (num_queries, hidden_dim)),
        "wc": r(ks[3], (hidden_dim, 38)), "bc": r(ks[4], (38,)),
        "wb1": r(ks[5], (hidden_dim, hidden_dim)), "bb1": r(ks[6], (hidden_dim,)),
        "wb2": r(ks[7], (hidden_dim, hidden_dim)), "bb2": r(ks[8], (hidden_dim,)),
        "wb3": r(ks[9], (hidden_dim, 4)), "bb3": r(ks[10], (4,)),
        "wa": r(ks[11], (hidden_dim, 4)), "ba": r(ks[12], (4,)),
        "ws": r(ks[13], (hidden_dim, 7)), "bs": r(ks[14], (7,)),
        "wcr": r(ks[15], (hidden_dim, 18)), "bcr": r(ks[16], (18,)),
    }


if __name__ == "__main__":
    B, C_IN, H, W = 2, 8, 8, 8
    HIDDEN, NUM_QUERIES, NUM_DEC_LAYERS = 32, 8, 3

    key = jax.random.PRNGKey(0)
    k_src, k_params = jax.random.split(key)
    src = jax.random.normal(k_src, (B, C_IN, H, W), dtype=jnp.float32)
    mask = jnp.zeros((B, H, W), dtype=bool)
    params = make_params(k_params, C_IN, HIDDEN, NUM_QUERIES)
    packed = pack_params(params)   # one-time weight packing (outside forward)

    out, hs = detr_forward(src, mask, params, packed, NUM_DEC_LAYERS)
    out = jax.tree_util.tree_map(jax.block_until_ready, out)

    # sanity: shapes match the PyTorch module's contract
    assert out["pred_logits"].shape == (B, NUM_QUERIES, 38)
    assert out["pred_boxes"].shape == (B, NUM_QUERIES, 4)
    assert out["attention_distribution"].shape == (B, NUM_QUERIES, 4)
    assert out["spatial_distribution"].shape == (B, NUM_QUERIES, 7)
    assert out["contacting_distribution"].shape == (B, NUM_QUERIES, 18)

    # correctness check of the fused Pallas head kernel against plain JAX (f32
    # reference; kernel runs bf16 inputs with f32 accumulation -> loosened tol)
    cls_r, box_r, arl_r, srl_r, crl_r = heads_ref(hs, params)
    for got, want in [
        (out["pred_logits"], cls_r[-1]),
        (out["pred_boxes"], box_r[-1]),
        (out["attention_distribution"], arl_r[-1]),
        (out["spatial_distribution"], srl_r[-1]),
        (out["contacting_distribution"], crl_r[-1]),
    ]:
        assert jnp.allclose(got, want, atol=2e-2, rtol=2e-2), (
            float(jnp.max(jnp.abs(got - want))))

    print("KERNEL_OK")
</pallas_src>

<mosaic_0001>
module attributes {stable_mosaic.version = 11 : i64} {
  func.func @_input_proj_kernel(%arg0: i32, %arg1: i32, %arg2: memref<1x8x64xbf16, #tpu.memory_space<vmem>>, %arg3: memref<8x32xbf16, #tpu.memory_space<vmem>>, %arg4: memref<1x32xf32, #tpu.memory_space<vmem>>, %arg5: memref<1x64x32xbf16, #tpu.memory_space<vmem>>) attributes {dimension_semantics = [#tpu.dimension_semantics<parallel>, #tpu.dimension_semantics<parallel>], iteration_bounds = array<i64: 2, 1>, scalar_prefetch = 0 : i64, scratch_operands = 0 : i64, tpu.core_type = #tpu.core_type<tc>, window_params = [{transform_indices = @transform_0, window_bounds = array<i64: 1, 8, 64>}, {pipeline_mode = #tpu.pipeline_mode<synchronous>, transform_indices = @transform_1, window_bounds = array<i64: 8, 32>}, {pipeline_mode = #tpu.pipeline_mode<synchronous>, transform_indices = @transform_2, window_bounds = array<i64: 1, 32>}, {transform_indices = @transform_3, window_bounds = array<i64: 1, 64, 32>}]} {
    %c0 = arith.constant 0 : index
    %c0_0 = arith.constant 0 : index
    %c0_1 = arith.constant 0 : index
    %0 = vector.load %arg2[%c0, %c0_0, %c0_1] : memref<1x8x64xbf16, #tpu.memory_space<vmem>>, vector<1x8x64xbf16>
    %1 = vector.shape_cast %0 : vector<1x8x64xbf16> to vector<8x64xbf16>
    %c0_2 = arith.constant 0 : index
    %c0_3 = arith.constant 0 : index
    %2 = vector.load %arg3[%c0_2, %c0_3] : memref<8x32xbf16, #tpu.memory_space<vmem>>, vector<8x32xbf16>
    %cst = arith.constant dense<0.000000e+00> : vector<64x32xf32>
    %3 = tpu.matmul %1, %2, %cst {dimension_numbers = #tpu.dot_dimension_numbers<[0], [0], [1], [1], [0, 1, 1, 1], [], []>} : vector<8x64xbf16>, vector<8x32xbf16>, vector<64x32xf32> -> vector<64x32xf32>
    %c0_4 = arith.constant 0 : index
    %c0_5 = arith.constant 0 : index
    %4 = vector.load %arg4[%c0_4, %c0_5] : memref<1x32xf32, #tpu.memory_space<vmem>>, vector<1x32xf32>
    %5 = vector.broadcast %4 : vector<1x32xf32> to vector<64x32xf32>
    %6 = arith.addf %3, %5 : vector<64x32xf32>
    %7 = arith.truncf %6 : vector<64x32xf32> to vector<64x32xbf16>
    %c0_6 = arith.constant 0 : index
    %c0_7 = arith.constant 0 : index
    %c0_8 = arith.constant 0 : index
    %8 = vector.load %arg5[%c0_6, %c0_7, %c0_8] : memref<1x64x32xbf16, #tpu.memory_space<vmem>>, vector<1x64x32xbf16>
    %9 = vector.shape_cast %8 : vector<1x64x32xbf16> to vector<64x32xbf16>
    %10 = vector.shape_cast %7 : vector<64x32xbf16> to vector<1x64x32xbf16>
    tpu.vector_store %arg5[%c0_6, %c0_7, %c0_8], %10 {strides = array<i32>} : memref<1x64x32xbf16, #tpu.memory_space<vmem>>, vector<1x64x32xbf16>,
    return
  }
  func.func @transform_0(%arg0: i32, %arg1: i32) -> (i32, i32, i32) {
    %c0_i32 = arith.constant 0 : i32
    %c0_i32_0 = arith.constant 0 : i32
    return %arg0, %c0_i32, %arg1 : i32, i32, i32
  }
  func.func @transform_1(%arg0: i32, %arg1: i32) -> (i32, i32) {
    %c0_i32 = arith.constant 0 : i32
    %c0_i32_0 = arith.constant 0 : i32
    %c0_i32_1 = arith.constant 0 : i32
    return %c0_i32, %c0_i32_0 : i32, i32
  }
  func.func @transform_2(%arg0: i32, %arg1: i32) -> (i32, i32) {
    %c0_i32 = arith.constant 0 : i32
    %c0_i32_0 = arith.constant 0 : i32
    %c0_i32_1 = arith.constant 0 : i32
    return %c0_i32, %c0_i32_0 : i32, i32
  }
  func.func @transform_3(%arg0: i32, %arg1: i32) -> (i32, i32, i32) {
    %c0_i32 = arith.constant 0 : i32
    %c0_i32_0 = arith.constant 0 : i32
    return %arg0, %arg1, %c0_i32 : i32, i32, i32
  }
}

</mosaic_0001>

<llo_original>
// kernel: tpu_custom_call.1
$region0: #{tpu_custom_call.1}
  #allocation0 [shape = 'u32[]', space=smem, size = 0x4, offset = 0x4, fixed_abs, tag = 'smem constant byte address 0x4 - core index']
  #allocation1 [shape = 'u32[144,128]{1,0:T(1,128)}', space=vmem, size = 0x12000, scoped, tag = 'internal scratch']
  %s0 = inlined_call_operand.hbm [shape: bf16[2,8,64], index: 0, kind: input, shape index: {}]
  %s1 = inlined_call_operand.hbm [shape: bf16[8,32], index: 1, kind: input, shape index: {}]
  %s2 = inlined_call_operand.vmem [shape: f32[1,32], index: 2, kind: input, shape index: {}]
  %s3 = inlined_call_operand.vmem [shape: bf16[2,64,32], index: 3, kind: output, shape index: {}]
  %s4 = sld [smem:[#allocation0]]
  $region53: #{tpu_custom_call.1} parent=0
    _
  %s6 = ssub.s32 1, %s4
  %s7 = scalar_select 0, %s6, %s4
  $region1: #{tpu_custom_call.1} parent=0
    #allocation2 [shape = 'u8[4096]{0}', space=vmem, size = 0x1000, scoped, tag = 'input window, operand 0']
    #allocation3 [shape = 's32[2]{0}', space=sflag, size = 0x8, scoped, tag = 'scoped memory for tpu_custom_call.1']
    #allocation4 [shape = 'u8[2048]{0}', space=vmem, size = 0x800, scoped, tag = 'input window, operand 1, single buffered']
    #allocation5 [shape = 's32[1]{0}', space=sflag, size = 0x4, scoped, tag = 'scoped memory for tpu_custom_call.1']
    %8 = vsyncpa [#allocation3], 0
    %s9 = scalar_lea.sflag [#allocation3], 1
    %10 = vsyncpa %s9, 0
    %11 = vsyncpa [#allocation5], 0
    loop: start=0, step=1, limit=4
    $region2: #{tpu_custom_call.1} parent=1 // loop_pre_header
      _
    $region3: #{tpu_custom_call.1} parent=1 // loop_header
      %s13 = sphi 0, %s17
      %p14 = scmp.ge.s32.totalorder %s13, 4
      %s20 = sphi 0, %s32
      %s21 = sphi 0, %s28
      %s22 = sphi 0, %s20
      %s23 = sphi 0, %s21
      %s24 = sphi 0, %s22
      %s25 = sphi 0, %s23
      %s37 = sphi 0, %s39
      %s40 = sphi 0, %s37
      %s41 = sphi 0, %s40
      %s57 = sphi 0, %s41
      %s61 = sphi 0, %s61
      %s63 = sphi 0, %s61
      %s64 = sphi 0, %s63
      %s78 = sphi 0, %s64
      %s82 = sphi 0, %s82
      %s84 = sphi 0, %s82
      %s85 = sphi 0, %s84
      %s99 = sphi 0, %s85
      %s107 = sphi 0, %s109
      %s110 = sphi 0, %s107
      %s111 = sphi 0, %s110
      %s127 = sphi 0, %s111
    $region4: #{tpu_custom_call.1} parent=1 // loop_header_branch
      %16 = sbr.rel (%p14) target = $region8
    $region5: #{tpu_custom_call.1} parent=1 // loop_body
      %s18 = ssub.s32 %s13, 1
      %s19 = ssub.s32 %s13, 2
      %s26 = sadd.s32 1, %s21
      %p27 = scmp.ge.s32.totalorder %s26, 1
      %s28 = scalar_select %p27, 0, %s26
      %s29 = sadd.s32 1, %s20
      %s30 = scalar_select %p27, %s29, %s20
      %p31 = scmp.ge.s32.totalorder %s30, 2
      %s32 = scalar_select %p31, 0, %s30
      %s33 = ssub.s32 %s20, %s32
      %s34 = ssub.s32 %s21, %s28
      %s35 = sor.u32 %s33, %s34
      %p36 = scmp.eq.s32.totalorder %s35, 0
      %s38 = sadd.s32 %s37, 1
      %s39 = scalar_select %p36, %s37, %s38
      %p42 = pneg %p36
      %p43 = scmp.eq.s32.totalorder %s13, 1
      %p44 = por %p42, %p43
      %p45 = scmp.ne.s32.totalorder %s37, %s40
      %p46 = scmp.eq.s32.totalorder %s13, 0
      %p47 = por %p45, %p46
      %p48 = scmp.ne.s32.totalorder %s37, %s40
      %p49 = scmp.eq.s32.totalorder %s18, 1
      %p50 = por %p48, %p49
      %p51 = scmp.ne.s32.totalorder %s40, %s41
      %p52 = scmp.eq.s32.totalorder %s18, 0
      %p53 = por %p51, %p52
      %p54 = scmp.ne.s32.totalorder %s40, %s41
      %p55 = scmp.eq.s32.totalorder %s19, 1
      %p56 = por %p54, %p55
      %p58 = scmp.ne.s32.totalorder %s41, %s57
      %p59 = scmp.eq.s32.totalorder %s19, 0
      %p60 = por %p58, %p59
      %s62 = sadd.s32 %s61, 1
      %p65 = scmp.eq.s32.totalorder %s13, 1
      %p66 = scmp.ne.s32.totalorder %s61, %s63
      %p67 = scmp.eq.s32.totalorder %s13, 0
      %p68 = por %p66, %p67
      %p69 = scmp.ne.s32.totalorder %s61, %s63
      %p70 = scmp.eq.s32.totalorder %s18, 1
      %p71 = por %p69, %p70
      %p72 = scmp.ne.s32.totalorder %s63, %s64
      %p73 = scmp.eq.s32.totalorder %s18, 0
      %p74 = por %p72, %p73
      %p75 = scmp.ne.s32.totalorder %s63, %s64
      %p76 = scmp.eq.s32.totalorder %s19, 1
      %p77 = por %p75, %p76
      %p79 = scmp.ne.s32.totalorder %s64, %s78
      %p80 = scmp.eq.s32.totalorder %s19, 0
      %p81 = por %p79, %p80
      %s83 = sadd.s32 %s82, 1
      %p86 = scmp.eq.s32.totalorder %s13, 1
      %p87 = scmp.ne.s32.totalorder %s82, %s84
      %p88 = scmp.eq.s32.totalorder %s13, 0
      %p89 = por %p87, %p88
      %p90 = scmp.ne.s32.totalorder %s82, %s84
      %p91 = scmp.eq.s32.totalorder %s18, 1
      %p92 = por %p90, %p91
      %p93 = scmp.ne.s32.totalorder %s84, %s85
      %p94 = scmp.eq.s32.totalorder %s18, 0
      %p95 = por %p93, %p94
      %p96 = scmp.ne.s32.totalorder %s84, %s85
      %p97 = scmp.eq.s32.totalorder %s19, 1
      %p98 = por %p96, %p97
      %p100 = scmp.ne.s32.totalorder %s85, %s99
      %p101 = scmp.eq.s32.totalorder %s19, 0
      %p102 = por %p100, %p101
      %s103 = ssub.s32 %s20, %s32
      %s104 = ssub.s32 %s21, %s28
      %s105 = sor.u32 %s103, %s104
      %p106 = scmp.eq.s32.totalorder %s105, 0
      %s108 = sadd.s32 %s107, 1
      %s109 = scalar_select %p106, %s107, %s108
      %p112 = pneg %p106
      %p113 = scmp.eq.s32.totalorder %s13, 1
      %p114 = por %p112, %p113
      %p115 = scmp.ne.s32.totalorder %s107, %s110
      %p116 = scmp.eq.s32.totalorder %s13, 0
      %p117 = por %p115, %p116
      %p118 = scmp.ne.s32.totalorder %s107, %s110
      %p119 = scmp.eq.s32.totalorder %s18, 1
      %p120 = por %p118, %p119
      %p121 = scmp.ne.s32.totalorder %s110, %s111
      %p122 = scmp.eq.s32.totalorder %s18, 0
      %p123 = por %p121, %p122
      %p124 = scmp.ne.s32.totalorder %s110, %s111
      %p125 = scmp.eq.s32.totalorder %s19, 1
      %p126 = por %p124, %p125
      %p128 = scmp.ne.s32.totalorder %s111, %s127
      %p129 = scmp.eq.s32.totalorder %s19, 0
      %p130 = por %p128, %p129
      %p131 = scmp.le.s32.totalorder 1, %s13
      %p132 = scmp.lt.s32.totalorder %s13, 3
      %p133 = pnand %p131, %p132
      %p134 = pneg %p133
      // Predicated region
      $region9: #{tpu_custom_call.1} parent=5 // pred_check
        _
      $region10: #{tpu_custom_call.1} parent=5 // pred_check_branch
        %136 = sbr.rel (%p133) target = $region12
      $region11: #{tpu_custom_call.1} parent=5 // pred_region
        %s137 = ssub.s32 %s13, 1
        // Predicated region
        $region13: #{tpu_custom_call.1} parent=11 // pred_check
          %p138 = pneg %p74
        $region14: #{tpu_custom_call.1} parent=11 // pred_check_branch
          %140 = sbr.rel (%p138) target = $region16
        $region15: #{tpu_custom_call.1} parent=11 // pred_region
          %s142 = ssub.s32 64, 64
          %143 = vsyncadd [#allocation5], %s142
          %s145 = sshll.u32 [#allocation4], 4
          %s146 = int_to_ptr.vmem [resolvable:$true] %s145
          %148 = dma.hbm_to_vmem [thread:$0]  %s1, 64, %s146, [#allocation5]
        $region16: #{tpu_custom_call.1} parent=11 // pred_fallthru
          _
        // Predicated region
        $region17: #{tpu_custom_call.1} parent=11 // pred_check
          %p149 = pneg %p95
        $region18: #{tpu_custom_call.1} parent=11 // pred_check_branch
          %151 = sbr.rel (%p149) target = $region20
        $region19: #{tpu_custom_call.1} parent=11 // pred_region
          _
        $region20: #{tpu_custom_call.1} parent=11 // pred_fallthru
          _
      $region12: #{tpu_custom_call.1} parent=5 // pred_fallthru
        _
      %p152 = scmp.lt.s32.totalorder %s13, 2
      // Predicated region
      $region21: #{tpu_custom_call.1} parent=5 // pred_check
        %p153 = pneg %p152
      $region22: #{tpu_custom_call.1} parent=5 // pred_check_branch
        %155 = sbr.rel (%p153) target = $region24
      $region23: #{tpu_custom_call.1} parent=5 // pred_region
        // Predicated region
        $region25: #{tpu_custom_call.1} parent=23 // pred_check
          %p156 = pneg %p47
        $region26: #{tpu_custom_call.1} parent=23 // pred_check_branch
          %158 = sbr.rel (%p156) target = $region28
        $region27: #{tpu_custom_call.1} parent=23 // pred_region
          %s159 = sand.u32 %s37, 1
          %s160 = scalar_lea.sflag [#allocation3], %s159
          %s161 = sand.u32 %s37, 1
          %s162 = smul.addr %s161, 4
          %s163 = scalar_lea.vmem [#allocation2], %s162
          %s165 = ssub.s32 64, 64
          %166 = vsyncadd %s160, %s165
          %s167 = sadd.s32 %s21, %s20
          %s168 = smul.addr %s167, 64
          %s169 = scalar_lea.hbm %s0, %s168
          %s171 = sshll.u32 %s163, 4
          %s172 = int_to_ptr.vmem [resolvable:$true] %s171
          %174 = dma.hbm_to_vmem [thread:$0]  %s169, 64, %s172, %s160
        $region28: #{tpu_custom_call.1} parent=23 // pred_fallthru
          _
      $region24: #{tpu_custom_call.1} parent=5 // pred_fallthru
        _
      %p175 = scmp.le.s32.totalorder 1, %s13
      %p176 = scmp.lt.s32.totalorder %s13, 3
      %p177 = pnand %p175, %p176
      %p178 = pneg %p177
      // Predicated region
      $region29: #{tpu_custom_call.1} parent=5 // pred_check
        _
      $region30: #{tpu_custom_call.1} parent=5 // pred_check_branch
        %180 = sbr.rel (%p177) target = $region32
      $region31: #{tpu_custom_call.1} parent=5 // pred_region
        %s181 = ssub.s32 %s13, 1
        %s182 = sand.u32 %s40, 1
        %s183 = scalar_lea.sflag [#allocation3], %s182
        %s184 = sand.u32 %s40, 1
        %s185 = smul.addr %s184, 4
        %s186 = scalar_lea.vmem [#allocation2], %s185
        // Predicated region
        $region33: #{tpu_custom_call.1} parent=31 // pred_check
          %p187 = pneg %p53
        $region34: #{tpu_custom_call.1} parent=31 // pred_check_branch
          %189 = sbr.rel (%p187) target = $region36
        $region35: #{tpu_custom_call.1} parent=31 // pred_region
          %190 = dma.done %s183, 64
        $region36: #{tpu_custom_call.1} parent=31 // pred_fallthru
          _
        // Predicated region
        $region37: #{tpu_custom_call.1} parent=31 // pred_check
          %p191 = pneg %p74
        $region38: #{tpu_custom_call.1} parent=31 // pred_check_branch
          %193 = sbr.rel (%p191) target = $region40
        $region39: #{tpu_custom_call.1} parent=31 // pred_region
          %194 = dma.done [#allocation5], 64
        $region40: #{tpu_custom_call.1} parent=31 // pred_fallthru
          _
        %s195 = sand.u32 %s40, 1
        %s196 = scalar_lea.sflag [#allocation3], %s195
        %s197 = sand.u32 %s40, 1
        %s198 = smul.addr %s197, 4
        %s199 = scalar_lea.vmem [#allocation2], %s198
        %p200 = pneg %p53
        %p201 = pneg %p50
        %p202 = pneg %p74
        %p203 = pneg %p71
        %p204 = pneg %p95
        %p205 = pneg %p92
        %p206 = pneg %p123
        %p207 = pneg %p120
        %s208 = smul.u32 8, %s23
        %p209 = scmp.lt.s32.totalorder %s22, 1
        %s210 = scalar_select %p209, %s22, 1
        %p211 = scmp.lt.s32.totalorder %s208, 7
        %s212 = scalar_select %p211, %s208, 7
        %s213 = smul.addr %s210, 8
        %s214 = sadd.s32 %s212, %s213
        %s215 = smul.addr %s214, 4
        %s216 = scalar_lea.vmem %s3, %s215
        %s217 = smul.u32 8, %s23
        %p218 = scmp.lt.s32.totalorder %s22, 1
        %s219 = scalar_select %p218, %s22, 1
        %p220 = scmp.lt.s32.totalorder %s217, 7
        %s221 = scalar_select %p220, %s217, 7
        %s222 = smul.addr %s219, 8
        %s223 = sadd.s32 %s221, %s222
        %s224 = smul.addr %s223, 4
        %s225 = scalar_lea.vmem %s3, %s224
        %s226 = smul.u32 8, %s23
        %v228 = vld [vmem:[%s186] sm:$0xf]
        %v229 = vld [vmem:[#allocation4] sm:$0xf]
        %v230 = vld [vmem:[%s2] sm:$0x1]
        %v232 = vlaneseq
        %v233 = vshrl.u32 %v232, 7
        %v234 = vsub.s32 0, %v233
        %v235 = vrot.slane %v230, %v234
        %237 = vxpose.xlu0.c.b16.start [1/8] %v228, 128
        %238 = vxpose.xlu0.c.b16.cont [2/8] 0, 128
        %239 = vxpose.xlu0.c.b16.cont [3/8] 0, 128
        %240 = vxpose.xlu0.c.b16.cont [4/8] 0, 128
        %241 = vxpose.xlu0.c.b16.cont [5/8] 0, 128
        %242 = vxpose.xlu0.c.b16.cont [6/8] 0, 128
        %243 = vxpose.xlu0.c.b16.cont [7/8] 0, 128
        %244 = vxpose.xlu0.c.b16.end [8/8] 0, 128
        %v245 = vpop.trf.xlu0
        %v246 = vpop.trf.xlu0
        %v247 = vpop.trf.xlu0
        %v248 = vpop.trf.xlu0
        %v249 = vpop.trf.xlu0
        %v250 = vpop.trf.xlu0
        %v251 = vpop.trf.xlu0
        %v252 = vpop.trf.xlu0
        %vm253 = vcmask 64512
        %v255 = vsel %vm253, %v245, 0
        %v258 = vsel %vm253, %v246, 0
        %v261 = vsel %vm253, %v247, 0
        %v264 = vsel %vm253, %v248, 0
        %vm266 = vcmask 1043456
        %v268 = vsel %vm266, %v229, 0
        %270 = vmatprep.subr.bf16.mxu0 0
        %271 = vmatpush1.bf16.msra.mxu0 %v268
        %272 = vmatprep.subr.bf16.mxu0 0
        %273 = vmatpush1.bf16.msra.mxu0 0
        %274 = vmatprep.subr.bf16.mxu0 0
        %275 = vmatpush1.bf16.msra.mxu0 0
        %276 = vmatprep.subr.bf16.mxu0 0
        %277 = vmatpush1.bf16.msra.mxu0 0
        %278 = vmatprep.subr.bf16.mxu0 0
        %279 = vmatpush1.bf16.msra.mxu0 0
        %280 = vmatprep.subr.bf16.mxu0 0
        %281 = vmatpush1.bf16.msra.mxu0 0
        %282 = vmatprep.subr.bf16.mxu0 0
        %283 = vmatpush1.bf16.msra.mxu0 0
        %284 = vmatprep.subr.bf16.mxu0 0
        %285 = vmatpush1.bf16.msra.mxu0 0
        %286 = vmatprep.subr.bf16.mxu0 0
        %287 = vmatpush1.bf16.msra.mxu0 0
        %288 = vmatprep.subr.bf16.mxu0 0
        %289 = vmatpush1.bf16.msra.mxu0 0
        %290 = vmatprep.subr.bf16.mxu0 0
        %291 = vmatpush1.bf16.msra.mxu0 0
        %292 = vmatprep.subr.bf16.mxu0 0
        %293 = vmatpush1.bf16.msra.mxu0 0
        %294 = vmatprep.subr.bf16.mxu0 0
        %295 = vmatpush1.bf16.msra.mxu0 0
        %296 = vmatprep.subr.bf16.mxu0 0
        %297 = vmatpush1.bf16.msra.mxu0 0
        %298 = vmatprep.subr.bf16.mxu0 0
        %299 = vmatpush1.bf16.msra.mxu0 0
        %300 = vmatprep.subr.bf16.mxu0 0
        %301 = vmatpush1.bf16.msra.mxu0 0
        %302 = vmatprep.mubr.bf16.mxu0 0
        %303 = vmatmul.mubr.bf16.gmra.mrb[0].mxu0 %v255
        %v304 = vpop.f32.mrb[0].mxu0
        %v305 = vadd.f32 %v235, %v304
        %v306 = vpop.f32.mrb[0].mxu0
        %v307 = vpop.f32.mrb[0].mxu0
        %v308 = vadd.f32 %v235, %v307
        %v309 = vpop.f32.mrb[0].mxu0
        %310 = vmatprep.mubr.bf16.mxu0 0
        %311 = vmatmul.mubr.bf16.gmra.mrb[0].mxu0 %v258
        %v312 = vpop.f32.mrb[0].mxu0
        %v313 = vadd.f32 %v235, %v312
        %v314 = vpop.f32.mrb[0].mxu0
        %v315 = vpop.f32.mrb[0].mxu0
        %v316 = vadd.f32 %v235, %v315
        %v317 = vpop.f32.mrb[0].mxu0
        %318 = vmatprep.mubr.bf16.mxu0 0
        %319 = vmatmul.mubr.bf16.gmra.mrb[0].mxu0 %v261
        %v320 = vpop.f32.mrb[0].mxu0
        %v321 = vadd.f32 %v235, %v320
        %v322 = vpop.f32.mrb[0].mxu0
        %v323 = vpop.f32.mrb[0].mxu0
        %v324 = vadd.f32 %v235, %v323
        %v325 = vpop.f32.mrb[0].mxu0
        %326 = vmatprep.mubr.bf16.mxu0 0
        %327 = vmatmul.mubr.bf16.gmra.mrb[0].mxu0 %v264
        %v328 = vpop.f32.mrb[0].mxu0
        %v329 = vadd.f32 %v235, %v328
        %v330 = vpop.f32.mrb[0].mxu0
        %v331 = vpop.f32.mrb[0].mxu0
        %v332 = vadd.f32 %v235, %v331
        %v333 = vpop.f32.mrb[0].mxu0
        %334 = vdwg.mxu0
        %v335 = vpack.c.bf16 %v308, %v305
        %v336 = vpack.c.bf16 %v316, %v313
        %v337 = vpack.c.bf16 %v324, %v321
        %v338 = vpack.c.bf16 %v332, %v329
        %v343 = vunpack.c.l.b16 %v335
        %v344 = vunpack.c.h.b16 %v335
        %v345 = vunpack.c.l.b16 %v336
        %v346 = vunpack.c.h.b16 %v336
        %v347 = vunpack.c.l.b16 %v337
        %v348 = vunpack.c.h.b16 %v337
        %v349 = vunpack.c.l.b16 %v338
        %v350 = vunpack.c.h.b16 %v338
        %v351 = vpack.c.b16 %v343, %v343
        %v352 = vpack.c.b16 %v344, %v344
        %v353 = vpack.c.b16 %v345, %v345
        %v354 = vpack.c.b16 %v346, %v346
        %v355 = vpack.c.b16 %v347, %v347
        %v356 = vpack.c.b16 %v348, %v348
        %v357 = vpack.c.b16 %v349, %v349
        %v358 = vpack.c.b16 %v350, %v350
        %vm367 = vcmask 257024
        %368 = vst.msk [vmem:[%s225] sm:$0xf] %vm367, %v351
        %369 = vst.msk [vmem:[%s225 + $0x4] sm:$0xf] %vm367, %v352
        %370 = vst.msk [vmem:[%s225 + $0x8] sm:$0xf] %vm367, %v353
        %371 = vst.msk [vmem:[%s225 + $0xc] sm:$0xf] %vm367, %v354
        %372 = vst.msk [vmem:[%s225 + $0x10] sm:$0xf] %vm367, %v355
        %373 = vst.msk [vmem:[%s225 + $0x14] sm:$0xf] %vm367, %v356
        %374 = vst.msk [vmem:[%s225 + $0x18] sm:$0xf] %vm367, %v357
        %375 = vst.msk [vmem:[%s225 + $0x1c] sm:$0xf] %vm367, %v358
        %s376 = smul.u32 8, %s23
        %p377 = scmp.lt.s32.totalorder %s22, 1
        %s378 = scalar_select %p377, %s22, 1
        %p379 = scmp.lt.s32.totalorder %s376, 7
        %s380 = scalar_select %p379, %s376, 7
        %s381 = smul.addr %s378, 8
        %s382 = sadd.s32 %s380, %s381
        %s383 = smul.addr %s382, 4
        %s384 = scalar_lea.vmem %s3, %s383
        // Predicated region
        $region41: #{tpu_custom_call.1} parent=31 // pred_check
          %p385 = pneg %p120
        $region42: #{tpu_custom_call.1} parent=31 // pred_check_branch
          %387 = sbr.rel (%p385) target = $region44
        $region43: #{tpu_custom_call.1} parent=31 // pred_region
          %s388 = smul.u32 8, %s23
        $region44: #{tpu_custom_call.1} parent=31 // pred_fallthru
          _
      $region32: #{tpu_custom_call.1} parent=5 // pred_fallthru
        _
      %p389 = scmp.le.s32.totalorder 2, %s13
      // Predicated region
      $region45: #{tpu_custom_call.1} parent=5 // pred_check
        %p390 = pneg %p389
      $region46: #{tpu_custom_call.1} parent=5 // pred_check_branch
        %392 = sbr.rel (%p390) target = $region48
      $region47: #{tpu_custom_call.1} parent=5 // pred_region
        %s393 = ssub.s32 %s13, 2
        // Predicated region
        $region49: #{tpu_custom_call.1} parent=47 // pred_check
          %p394 = pneg %p126
        $region50: #{tpu_custom_call.1} parent=47 // pred_check_branch
          %396 = sbr.rel (%p394) target = $region52
        $region51: #{tpu_custom_call.1} parent=47 // pred_region
          %s397 = smul.u32 8, %s25
          %p398 = scmp.lt.s32.totalorder %s24, 1
          %s399 = scalar_select %p398, %s24, 1
          %p400 = scmp.lt.s32.totalorder %s397, 7
          %s401 = scalar_select %p400, %s397, 7
          %s402 = smul.addr %s399, 8
          %s403 = sadd.s32 %s401, %s402
          %s404 = smul.addr %s403, 4
          %s405 = scalar_lea.vmem %s3, %s404
        $region52: #{tpu_custom_call.1} parent=47 // pred_fallthru
          _
      $region48: #{tpu_custom_call.1} parent=5 // pred_fallthru
        _
    $region6: #{tpu_custom_call.1} parent=1 // loop_footer
      %s17 = sadd.s32 1, %s13
    $region7: #{tpu_custom_call.1} parent=1 // loop_footer_branch
      %12 = sbr.rel target = $region3
    $region8: #{tpu_custom_call.1} parent=1 // loop_exit
      _
    %406 = vsyncpa [#allocation3], 1
    %s407 = scalar_lea.sflag [#allocation3], 1
    %408 = vsyncpa %s407, 1
    %409 = vsyncpa [#allocation5], 1

</llo_original>
